<compile_context>
chip_gen: v7x
topology: tpu7x:2x2x1
jax: 0.10.0
libtpu: 0.0.40
codegen_flags: <defaults>
</compile_context>

<pallas_src>
import jax
import jax.numpy as jnp
from jax.experimental import pallas as pl
from jax.experimental.pallas import tpu as pltpu


def _round_up(x, m):
    return (x + m - 1) // m * m


def h2v_kernel(idx_ref, emb_ref, wt_ref, b_ref, out_ref):
    """Multi-hot gather+sum on the MXU, then project to hero logits.

    idx_ref : VMEM (Bp, 4)  int32 -- context hero ids (padded batch)
    emb_ref : VMEM (Vp, D)  f32   -- embedding table (padded vocab rows)
    wt_ref  : VMEM (D, Vp)  f32   -- linear weight, pre-transposed
    b_ref   : VMEM (1, Vp)  f32   -- linear bias (padded)
    out_ref : VMEM (Bp, Vp) f32   -- logits (padded)
    """
    Bp, Vp = out_ref.shape
    n_ctx = idx_ref.shape[1]

    idx = idx_ref[...]  # (Bp, n_ctx) int32
    col = jax.lax.broadcasted_iota(jnp.int32, (Bp, Vp), 1)

    # Multi-hot counts: counts[b, v] = #{j : idx[b, j] == v}  (handles repeats).
    counts = jnp.zeros((Bp, Vp), jnp.float32)
    for j in range(n_ctx):  # static, tiny unrolled loop
        counts = counts + (col == idx[:, j:j + 1]).astype(jnp.float32)

    # Embedding gather + sum as one MXU matmul: (Bp, Vp) @ (Vp, D) -> (Bp, D).
    e = jnp.dot(counts, emb_ref[...], preferred_element_type=jnp.float32)

    # Linear: (Bp, D) @ (D, Vp) + bias -> (Bp, Vp), lane-dense output.
    logits = jnp.dot(e, wt_ref[...], preferred_element_type=jnp.float32)
    out_ref[...] = logits + b_ref[...]


def hero2vec_forward(indices, emb_table, lin_w, lin_b):
    """indices: (B, 4) int32; emb_table: (V, D); lin_w: (V, D); lin_b: (V,)."""
    B, n_ctx = indices.shape
    V, D = emb_table.shape

    Bp = _round_up(max(B, 8), 8)      # sublane-dense output rows
    Vp = _round_up(V, 128)            # lane-dense vocab axis (129 -> 256)

    # Pad parameters / inputs at the wrapper; padded vocab rows are never hit
    # (indices < V) and padded batch rows are sliced off below.
    emb_p = jnp.zeros((Vp, D), jnp.float32).at[:V, :].set(emb_table)
    wt_p = jnp.zeros((D, Vp), jnp.float32).at[:, :V].set(lin_w.T)
    b_p = jnp.zeros((1, Vp), jnp.float32).at[:, :V].set(lin_b)
    idx_p = jnp.zeros((Bp, n_ctx), jnp.int32).at[:B, :].set(indices)
    # TODO(synk): nn.Embedding raises on out-of-range indices; here they would
    # silently select padded (zero) rows — clamp/validate upstream if untrusted.

    out_p = pl.pallas_call(
        h2v_kernel,
        out_shape=jax.ShapeDtypeStruct((Bp, Vp), jnp.float32),
        in_specs=[
            pl.BlockSpec(memory_space=pltpu.MemorySpace.VMEM),  # indices
            pl.BlockSpec(memory_space=pltpu.MemorySpace.VMEM),  # embedding table
            pl.BlockSpec(memory_space=pltpu.MemorySpace.VMEM),  # W^T (D, Vp)
            pl.BlockSpec(memory_space=pltpu.MemorySpace.VMEM),  # bias
        ],
        out_specs=pl.BlockSpec(memory_space=pltpu.MemorySpace.VMEM),
    )(idx_p, emb_p, wt_p, b_p)

    return out_p[:B, :V]


if __name__ == "__main__":
    # Module hyper-parameters (small but consistent with the module defaults).
    embedding_dim = 32
    heropool_size = 129
    batch = 2
    n_context = 4

    key = jax.random.PRNGKey(0)
    k_emb, k_w, k_b, k_idx = jax.random.split(key, 4)

    # Deterministic synthetic parameters (nn.Embedding / nn.Linear shapes).
    emb_table = jax.random.normal(k_emb, (heropool_size, embedding_dim), jnp.float32)
    lin_w = jax.random.normal(k_w, (heropool_size, embedding_dim), jnp.float32) * 0.1
    lin_b = jax.random.normal(k_b, (heropool_size,), jnp.float32) * 0.1

    indices = jax.random.randint(
        k_idx, (batch, n_context), 0, heropool_size, dtype=jnp.int32
    )

    out = hero2vec_forward(indices, emb_table, lin_w, lin_b)
    out = jax.block_until_ready(out)

    # Pure-JAX reference check.
    ref_emb = emb_table[indices].sum(axis=1)            # (B, D)
    ref = ref_emb @ lin_w.T + lin_b                     # (B, V)
    assert out.shape == (batch, heropool_size)
    assert jnp.allclose(out, ref, atol=1e-4, rtol=1e-4), "mismatch vs reference"

    print("KERNEL_OK")
</pallas_src>

<mosaic_0001>
module attributes {stable_mosaic.version = 11 : i64} {
  func.func @h2v_kernel(%arg0: memref<8x4xi32, #tpu.memory_space<vmem>>, %arg1: memref<256x32xf32, #tpu.memory_space<vmem>>, %arg2: memref<32x256xf32, #tpu.memory_space<vmem>>, %arg3: memref<1x256xf32, #tpu.memory_space<vmem>>, %arg4: memref<8x256xf32, #tpu.memory_space<vmem>>) attributes {dimension_semantics = [], scalar_prefetch = 0 : i64, scratch_operands = 0 : i64, tpu.core_type = #tpu.core_type<tc>} {
    %c0 = arith.constant 0 : index
    %c0_0 = arith.constant 0 : index
    %0 = vector.load %arg0[%c0, %c0_0] : memref<8x4xi32, #tpu.memory_space<vmem>>, vector<8x4xi32>
    %1 = tpu.iota {dimensions = array<i32: 1>} : vector<8x256xi32>
    %cst = arith.constant 0.000000e+00 : f32
    %2 = vector.broadcast %cst : f32 to vector<8x256xf32>
    %3 = vector.extract_strided_slice %0 {offsets = [0, 0], sizes = [8, 1], strides = [1, 1]} : vector<8x4xi32> to vector<8x1xi32>
    %4 = vector.broadcast %3 : vector<8x1xi32> to vector<8x256xi32>
    %5 = arith.cmpi eq, %1, %4 : vector<8x256xi32>
    %6 = arith.extui %5 : vector<8x256xi1> to vector<8x256xi32>
    %7 = arith.sitofp %6 : vector<8x256xi32> to vector<8x256xf32>
    %8 = arith.addf %2, %7 : vector<8x256xf32>
    %9 = vector.extract_strided_slice %0 {offsets = [0, 1], sizes = [8, 1], strides = [1, 1]} : vector<8x4xi32> to vector<8x1xi32>
    %10 = vector.broadcast %9 : vector<8x1xi32> to vector<8x256xi32>
    %11 = arith.cmpi eq, %1, %10 : vector<8x256xi32>
    %12 = arith.extui %11 : vector<8x256xi1> to vector<8x256xi32>
    %13 = arith.sitofp %12 : vector<8x256xi32> to vector<8x256xf32>
    %14 = arith.addf %8, %13 : vector<8x256xf32>
    %15 = vector.extract_strided_slice %0 {offsets = [0, 2], sizes = [8, 1], strides = [1, 1]} : vector<8x4xi32> to vector<8x1xi32>
    %16 = vector.broadcast %15 : vector<8x1xi32> to vector<8x256xi32>
    %17 = arith.cmpi eq, %1, %16 : vector<8x256xi32>
    %18 = arith.extui %17 : vector<8x256xi1> to vector<8x256xi32>
    %19 = arith.sitofp %18 : vector<8x256xi32> to vector<8x256xf32>
    %20 = arith.addf %14, %19 : vector<8x256xf32>
    %21 = vector.extract_strided_slice %0 {offsets = [0, 3], sizes = [8, 1], strides = [1, 1]} : vector<8x4xi32> to vector<8x1xi32>
    %22 = vector.broadcast %21 : vector<8x1xi32> to vector<8x256xi32>
    %23 = arith.cmpi eq, %1, %22 : vector<8x256xi32>
    %24 = arith.extui %23 : vector<8x256xi1> to vector<8x256xi32>
    %25 = arith.sitofp %24 : vector<8x256xi32> to vector<8x256xf32>
    %26 = arith.addf %20, %25 : vector<8x256xf32>
    %c0_1 = arith.constant 0 : index
    %c0_2 = arith.constant 0 : index
    %27 = vector.load %arg1[%c0_1, %c0_2] : memref<256x32xf32, #tpu.memory_space<vmem>>, vector<256x32xf32>
    %cst_3 = arith.constant dense<0.000000e+00> : vector<8x32xf32>
    %28 = tpu.matmul %26, %27, %cst_3 {dimension_numbers = #tpu.dot_dimension_numbers<[1], [0], [0], [1], [0, 0, 1, 1], [], []>} : vector<8x256xf32>, vector<256x32xf32>, vector<8x32xf32> -> vector<8x32xf32>
    %c0_4 = arith.constant 0 : index
    %c0_5 = arith.constant 0 : index
    %29 = vector.load %arg2[%c0_4, %c0_5] : memref<32x256xf32, #tpu.memory_space<vmem>>, vector<32x256xf32>
    %cst_6 = arith.constant dense<0.000000e+00> : vector<8x256xf32>
    %30 = tpu.matmul %28, %29, %cst_6 {dimension_numbers = #tpu.dot_dimension_numbers<[1], [0], [0], [1], [0, 0, 1, 1], [], []>} : vector<8x32xf32>, vector<32x256xf32>, vector<8x256xf32> -> vector<8x256xf32>
    %c0_7 = arith.constant 0 : index
    %c0_8 = arith.constant 0 : index
    %31 = vector.load %arg3[%c0_7, %c0_8] : memref<1x256xf32, #tpu.memory_space<vmem>>, vector<1x256xf32>
    %32 = vector.broadcast %31 : vector<1x256xf32> to vector<8x256xf32>
    %33 = arith.addf %30, %32 : vector<8x256xf32>
    %c0_9 = arith.constant 0 : index
    %c0_10 = arith.constant 0 : index
    %34 = vector.load %arg4[%c0_9, %c0_10] : memref<8x256xf32, #tpu.memory_space<vmem>>, vector<8x256xf32>
    tpu.vector_store %arg4[%c0_9, %c0_10], %33 {strides = array<i32>} : memref<8x256xf32, #tpu.memory_space<vmem>>, vector<8x256xf32>,
    return
  }
}

</mosaic_0001>

<llo_original>
// kernel: tpu_custom_call.1
$region0: #{tpu_custom_call.1}
  #allocation0 [shape = 'u32[]', space=smem, size = 0x4, offset = 0x4, fixed_abs, tag = 'smem constant byte address 0x4 - core index']
  #allocation1 [shape = 'u32[144,128]{1,0:T(1,128)}', space=vmem, size = 0x12000, scoped, tag = 'internal scratch']
  %s0 = inlined_call_operand.vmem [shape: s32[8,4], index: 0, kind: input, shape index: {}]
  %s1 = inlined_call_operand.vmem [shape: f32[256,32], index: 1, kind: input, shape index: {}]
  %s2 = inlined_call_operand.vmem [shape: f32[32,256], index: 2, kind: input, shape index: {}]
  %s3 = inlined_call_operand.vmem [shape: f32[1,256], index: 3, kind: input, shape index: {}]
  %s4 = inlined_call_operand.hbm [shape: f32[8,256], index: 4, kind: output, shape index: {}]
  %s5 = sld [smem:[#allocation0]]
  $region26: #{tpu_custom_call.1} parent=0
    _
  %s7 = ssub.s32 1, %s5
  %s8 = scalar_select 0, %s7, %s5
  $region1: #{tpu_custom_call.1} parent=0
    #allocation2 [shape = 'u8[8192]{0}', space=vmem, size = 0x2000, scoped, tag = 'output window, operand 0, single buffered']
    #allocation3 [shape = 's32[1]{0}', space=sflag, size = 0x4, scoped, tag = 'scoped memory for tpu_custom_call.1']
    %9 = vsyncpa [#allocation3], 0
    // Predicated region
    $region2: #{tpu_custom_call.1} parent=1 // pred_check
      _
    $region3: #{tpu_custom_call.1} parent=1 // pred_check_branch
      %11 = sbr.rel (0) target = $region5
    $region4: #{tpu_custom_call.1} parent=1 // pred_region
      _
    $region5: #{tpu_custom_call.1} parent=1 // pred_fallthru
      _
    // Predicated region
    $region6: #{tpu_custom_call.1} parent=1 // pred_check
      _
    $region7: #{tpu_custom_call.1} parent=1 // pred_check_branch
      %13 = sbr.rel (0) target = $region9
    $region8: #{tpu_custom_call.1} parent=1 // pred_region
      _
    $region9: #{tpu_custom_call.1} parent=1 // pred_fallthru
      _
    // Predicated region
    $region10: #{tpu_custom_call.1} parent=1 // pred_check
      _
    $region11: #{tpu_custom_call.1} parent=1 // pred_check_branch
      %15 = sbr.rel (0) target = $region13
    $region12: #{tpu_custom_call.1} parent=1 // pred_region
      _
    $region13: #{tpu_custom_call.1} parent=1 // pred_fallthru
      _
    // Predicated region
    $region14: #{tpu_custom_call.1} parent=1 // pred_check
      _
    $region15: #{tpu_custom_call.1} parent=1 // pred_check_branch
      %17 = sbr.rel (0) target = $region17
    $region16: #{tpu_custom_call.1} parent=1 // pred_region
      _
    $region17: #{tpu_custom_call.1} parent=1 // pred_fallthru
      _
    %v18 = vld [vmem:[%s0] sm:$0xff]
    %v19 = vlaneseq
    %v20 = vand.u32 %v19, 127
    %v21 = vadd.s32 %v20, 128
    %22 = vset.pattern.permute.xlu0 0
    %23 = vperm.xlu0 %22, %v18
    %v24 = vpop.permute.xlu0 %23
    %vm25 = vcmp.eq.s32.totalorder %v20, %v24
    %vm26 = vcmp.eq.s32.totalorder %v21, %v24
    %v27 = vsel %vm25, 1, 0
    %v28 = vsel %vm26, 1, 0
    %v29 = vcvt.s32.f32 %v27
    %v30 = vcvt.s32.f32 %v28
    %v31 = vadd.f32 %v29, 0.0
    %v32 = vadd.f32 %v30, 0.0
    %33 = vset.pattern.permute.xlu0 1
    %34 = vperm.xlu0 %33, %v18
    %v35 = vpop.permute.xlu0 %34
    %vm36 = vcmp.eq.s32.totalorder %v20, %v35
    %vm37 = vcmp.eq.s32.totalorder %v21, %v35
    %v38 = vsel %vm36, 1, 0
    %v39 = vsel %vm37, 1, 0
    %v40 = vcvt.s32.f32 %v38
    %v41 = vcvt.s32.f32 %v39
    %v42 = vadd.f32 %v31, %v40
    %v43 = vadd.f32 %v32, %v41
    %44 = vset.pattern.permute.xlu0 2
    %45 = vperm.xlu0 %44, %v18
    %v46 = vpop.permute.xlu0 %45
    %vm47 = vcmp.eq.s32.totalorder %v20, %v46
    %vm48 = vcmp.eq.s32.totalorder %v21, %v46
    %v49 = vsel %vm47, 1, 0
    %v50 = vsel %vm48, 1, 0
    %v51 = vcvt.s32.f32 %v49
    %v52 = vcvt.s32.f32 %v50
    %v53 = vadd.f32 %v42, %v51
    %v54 = vadd.f32 %v43, %v52
    %55 = vset.pattern.permute.xlu0 3
    %56 = vperm.xlu0 %55, %v18
    %v57 = vpop.permute.xlu0 %56
    %vm58 = vcmp.eq.s32.totalorder %v20, %v57
    %vm59 = vcmp.eq.s32.totalorder %v21, %v57
    %v60 = vsel %vm58, 1, 0
    %v61 = vsel %vm59, 1, 0
    %v62 = vcvt.s32.f32 %v60
    %v63 = vcvt.s32.f32 %v61
    %v64 = vadd.f32 %v53, %v62
    %v65 = vadd.f32 %v54, %v63
    %v66 = vld [vmem:[%s1] sm:$0xff]
    %v67 = vld [vmem:[%s1 + $0x8] sm:$0xff]
    %v68 = vld [vmem:[%s1 + $0x10] sm:$0xff]
    %v69 = vld [vmem:[%s1 + $0x18] sm:$0xff]
    %v70 = vld [vmem:[%s1 + $0x20] sm:$0xff]
    %v71 = vld [vmem:[%s1 + $0x28] sm:$0xff]
    %v72 = vld [vmem:[%s1 + $0x30] sm:$0xff]
    %v73 = vld [vmem:[%s1 + $0x38] sm:$0xff]
    %v74 = vld [vmem:[%s1 + $0x40] sm:$0xff]
    %v75 = vld [vmem:[%s1 + $0x48] sm:$0xff]
    %v76 = vld [vmem:[%s1 + $0x50] sm:$0xff]
    %v77 = vld [vmem:[%s1 + $0x58] sm:$0xff]
    %v78 = vld [vmem:[%s1 + $0x60] sm:$0xff]
    %v79 = vld [vmem:[%s1 + $0x68] sm:$0xff]
    %v80 = vld [vmem:[%s1 + $0x70] sm:$0xff]
    %v81 = vld [vmem:[%s1 + $0x78] sm:$0xff]
    %v82 = vld [vmem:[%s1 + $0x80] sm:$0xff]
    %v83 = vld [vmem:[%s1 + $0x88] sm:$0xff]
    %v84 = vld [vmem:[%s1 + $0x90] sm:$0xff]
    %v85 = vld [vmem:[%s1 + $0x98] sm:$0xff]
    %v86 = vld [vmem:[%s1 + $0xa0] sm:$0xff]
    %v87 = vld [vmem:[%s1 + $0xa8] sm:$0xff]
    %v88 = vld [vmem:[%s1 + $0xb0] sm:$0xff]
    %v89 = vld [vmem:[%s1 + $0xb8] sm:$0xff]
    %v90 = vld [vmem:[%s1 + $0xc0] sm:$0xff]
    %v91 = vld [vmem:[%s1 + $0xc8] sm:$0xff]
    %v92 = vld [vmem:[%s1 + $0xd0] sm:$0xff]
    %v93 = vld [vmem:[%s1 + $0xd8] sm:$0xff]
    %v94 = vld [vmem:[%s1 + $0xe0] sm:$0xff]
    %v95 = vld [vmem:[%s1 + $0xe8] sm:$0xff]
    %v96 = vld [vmem:[%s1 + $0xf0] sm:$0xff]
    %v97 = vld [vmem:[%s1 + $0xf8] sm:$0xff]
    %98 = vmatprep.subr.mxu0 0.0
    %99 = vmatpush1.msra.mxu0 %v66
    %100 = vmatprep.subr.mxu0 0.0
    %101 = vmatpush1.msra.mxu0 %v67
    %102 = vmatprep.subr.mxu0 0.0
    %103 = vmatpush1.msra.mxu0 %v68
    %104 = vmatprep.subr.mxu0 0.0
    %105 = vmatpush1.msra.mxu0 %v69
    %106 = vmatprep.subr.mxu0 0.0
    %107 = vmatpush1.msra.mxu0 %v70
    %108 = vmatprep.subr.mxu0 0.0
    %109 = vmatpush1.msra.mxu0 %v71
    %110 = vmatprep.subr.mxu0 0.0
    %111 = vmatpush1.msra.mxu0 %v72
    %112 = vmatprep.subr.mxu0 0.0
    %113 = vmatpush1.msra.mxu0 %v73
    %114 = vmatprep.subr.mxu0 0.0
    %115 = vmatpush1.msra.mxu0 %v74
    %116 = vmatprep.subr.mxu0 0.0
    %117 = vmatpush1.msra.mxu0 %v75
    %118 = vmatprep.subr.mxu0 0.0
    %119 = vmatpush1.msra.mxu0 %v76
    %120 = vmatprep.subr.mxu0 0.0
    %121 = vmatpush1.msra.mxu0 %v77
    %122 = vmatprep.subr.mxu0 0.0
    %123 = vmatpush1.msra.mxu0 %v78
    %124 = vmatprep.subr.mxu0 0.0
    %125 = vmatpush1.msra.mxu0 %v79
    %126 = vmatprep.subr.mxu0 0.0
    %127 = vmatpush1.msra.mxu0 %v80
    %128 = vmatprep.subr.mxu0 0.0
    %129 = vmatpush1.msra.mxu0 %v81
    %130 = vmatprep.subr.mxu0 0.0
    %131 = vmatpush1.msra.mxu0 %v82
    %132 = vmatprep.subr.mxu0 0.0
    %133 = vmatpush1.msra.mxu0 %v83
    %134 = vmatprep.subr.mxu0 0.0
    %135 = vmatpush1.msra.mxu0 %v84
    %136 = vmatprep.subr.mxu0 0.0
    %137 = vmatpush1.msra.mxu0 %v85
    %138 = vmatprep.subr.mxu0 0.0
    %139 = vmatpush1.msra.mxu0 %v86
    %140 = vmatprep.subr.mxu0 0.0
    %141 = vmatpush1.msra.mxu0 %v87
    %142 = vmatprep.subr.mxu0 0.0
    %143 = vmatpush1.msra.mxu0 %v88
    %144 = vmatprep.subr.mxu0 0.0
    %145 = vmatpush1.msra.mxu0 %v89
    %146 = vmatprep.subr.mxu0 0.0
    %147 = vmatpush1.msra.mxu0 %v90
    %148 = vmatprep.subr.mxu0 0.0
    %149 = vmatpush1.msra.mxu0 %v91
    %150 = vmatprep.subr.mxu0 0.0
    %151 = vmatpush1.msra.mxu0 %v92
    %152 = vmatprep.subr.mxu0 0.0
    %153 = vmatpush1.msra.mxu0 %v93
    %154 = vmatprep.subr.mxu0 0.0
    %155 = vmatpush1.msra.mxu0 %v94
    %156 = vmatprep.subr.mxu0 0.0
    %157 = vmatpush1.msra.mxu0 %v95
    %158 = vmatprep.subr.mxu0 0.0
    %159 = vmatpush1.msra.mxu0 %v96
    %160 = vmatprep.subr.mxu0 0.0
    %161 = vmatpush1.msra.mxu0 %v97
    %162 = vmatprep.mubr.f32.mxu0 %v65
    %163 = vmatmul.mubr.f32.gmra.mrb[0].mxu0 %v64
    %v164 = vpop.f32.mrb[0].mxu0
    %v165 = vadd.f32 0.0, %v164
    %v166 = vpop.f32.mrb[0].mxu0
    %167 = vdwg.mxu0
    %v168 = vld [vmem:[%s2] sm:$0xff]
    %v169 = vld [vmem:[%s2 + $0x8] sm:$0xff]
    %v170 = vld [vmem:[%s2 + $0x10] sm:$0xff]
    %v171 = vld [vmem:[%s2 + $0x18] sm:$0xff]
    %v172 = vld [vmem:[%s2 + $0x20] sm:$0xff]
    %v173 = vld [vmem:[%s2 + $0x28] sm:$0xff]
    %v174 = vld [vmem:[%s2 + $0x30] sm:$0xff]
    %v175 = vld [vmem:[%s2 + $0x38] sm:$0xff]
    %v176 = vld [vmem:[%s3] sm:$0x3]
    %v178 = vlaneseq
    %v179 = vshrl.u32 %v178, 7
    %v180 = vsub.s32 0, %v179
    %v181 = vrot.slane %v176, %v180
    %v182 = vlaneseq
    %v183 = vshrl.u32 %v182, 7
    %v184 = vsub.s32 1, %v183
    %v185 = vrot.slane %v176, %v184
    %vm188 = vcmask 261120
    %v190 = vsel %vm188, %v165, 0
    %192 = vmatprep.subr.mxu0 %v169
    %193 = vmatpush1.msra.mxu0 %v168
    %194 = vmatprep.subr.mxu0 %v171
    %195 = vmatpush1.msra.mxu0 %v170
    %196 = vmatprep.subr.mxu0 %v173
    %197 = vmatpush1.msra.mxu0 %v172
    %198 = vmatprep.subr.mxu0 %v175
    %199 = vmatpush1.msra.mxu0 %v174
    %200 = vmatprep.subr.mxu0 0.0
    %201 = vmatpush1.msra.mxu0 0.0
    %202 = vmatprep.subr.mxu0 0.0
    %203 = vmatpush1.msra.mxu0 0.0
    %204 = vmatprep.subr.mxu0 0.0
    %205 = vmatpush1.msra.mxu0 0.0
    %206 = vmatprep.subr.mxu0 0.0
    %207 = vmatpush1.msra.mxu0 0.0
    %208 = vmatprep.subr.mxu0 0.0
    %209 = vmatpush1.msra.mxu0 0.0
    %210 = vmatprep.subr.mxu0 0.0
    %211 = vmatpush1.msra.mxu0 0.0
    %212 = vmatprep.subr.mxu0 0.0
    %213 = vmatpush1.msra.mxu0 0.0
    %214 = vmatprep.subr.mxu0 0.0
    %215 = vmatpush1.msra.mxu0 0.0
    %216 = vmatprep.subr.mxu0 0.0
    %217 = vmatpush1.msra.mxu0 0.0
    %218 = vmatprep.subr.mxu0 0.0
    %219 = vmatpush1.msra.mxu0 0.0
    %220 = vmatprep.subr.mxu0 0.0
    %221 = vmatpush1.msra.mxu0 0.0
    %222 = vmatprep.subr.mxu0 0.0
    %223 = vmatpush1.msra.mxu0 0.0
    %224 = vmatprep.subr.mxu0 0.0
    %225 = vmatpush1.msra.mxu0 0.0
    %226 = vmatprep.subr.mxu0 0.0
    %227 = vmatpush1.msra.mxu0 0.0
    %228 = vmatprep.subr.mxu0 0.0
    %229 = vmatpush1.msra.mxu0 0.0
    %230 = vmatprep.subr.mxu0 0.0
    %231 = vmatpush1.msra.mxu0 0.0
    %232 = vmatprep.subr.mxu0 0.0
    %233 = vmatpush1.msra.mxu0 0.0
    %234 = vmatprep.subr.mxu0 0.0
    %235 = vmatpush1.msra.mxu0 0.0
    %236 = vmatprep.subr.mxu0 0.0
    %237 = vmatpush1.msra.mxu0 0.0
    %238 = vmatprep.subr.mxu0 0.0
    %239 = vmatpush1.msra.mxu0 0.0
    %240 = vmatprep.subr.mxu0 0.0
    %241 = vmatpush1.msra.mxu0 0.0
    %242 = vmatprep.subr.mxu0 0.0
    %243 = vmatpush1.msra.mxu0 0.0
    %244 = vmatprep.subr.mxu0 0.0
    %245 = vmatpush1.msra.mxu0 0.0
    %246 = vmatprep.subr.mxu0 0.0
    %247 = vmatpush1.msra.mxu0 0.0
    %248 = vmatprep.subr.mxu0 0.0
    %249 = vmatpush1.msra.mxu0 0.0
    %250 = vmatprep.subr.mxu0 0.0
    %251 = vmatpush1.msra.mxu0 0.0
    %252 = vmatprep.subr.mxu0 0.0
    %253 = vmatpush1.msra.mxu0 0.0
    %254 = vmatprep.subr.mxu0 0.0
    %255 = vmatpush1.msra.mxu0 0.0
    %256 = vmatprep.mubr.f32.mxu0 0.0
    %257 = vmatmul.mubr.f32.gmra.mrb[0].mxu0 %v190
    %v258 = vpop.f32.mrb[0].mxu0
    %v259 = vadd.f32 %v181, %v258
    %v260 = vpop.f32.mrb[0].mxu0
    %v261 = vadd.f32 %v185, %v260
    %262 = vdwg.mxu0
    %263 = vst [vmem:[#allocation2] sm:$0xff] %v259
    %264 = vst [vmem:[#allocation2 + $0x8] sm:$0xff] %v261
    // Predicated region
    $region18: #{tpu_custom_call.1} parent=1 // pred_check
      _
    $region19: #{tpu_custom_call.1} parent=1 // pred_check_branch
      %266 = sbr.rel (0) target = $region21
    $region20: #{tpu_custom_call.1} parent=1 // pred_region
      %s268 = ssub.s32 256, 256
      %269 = vsyncadd [#allocation3], %s268
      %s271 = sshll.u32 [#allocation2], 4
      %s272 = int_to_ptr.vmem [resolvable:$true] %s271
      %274 = dma.vmem_to_hbm [thread:$0]  %s272, 256, %s4, [#allocation3]
    $region21: #{tpu_custom_call.1} parent=1 // pred_fallthru
      _
    // Predicated region
    $region22: #{tpu_custom_call.1} parent=1 // pred_check
      _
    $region23: #{tpu_custom_call.1} parent=1 // pred_check_branch
      %276 = sbr.rel (0) target = $region25
    $region24: #{tpu_custom_call.1} parent=1 // pred_region
      %277 = dma.done [#allocation3], 256
    $region25: #{tpu_custom_call.1} parent=1 // pred_fallthru
      _
    %278 = vsyncpa [#allocation3], 1

</llo_original>
